<compile_context>
chip_gen: v7x
topology: tpu7x:2x2x1
jax: 0.10.0
libtpu: 0.0.40
codegen_flags: <defaults>
</compile_context>

<pallas_src>
import functools

import jax
import jax.numpy as jnp
import numpy as np
from jax.experimental import pallas as pl
from jax.experimental.pallas import tpu as pltpu


def _round_up(x, m):
    return ((x + m - 1) // m) * m


# ----------------------------------------------------------------------------
# Kernels
# ----------------------------------------------------------------------------
def _rgb_loss_kernel(rgb_ref, tgt_ref, m_ref, out_ref, sse_ref, cnt_ref):
    """Masked MSE * 10 over flat lane-packed (rows, 128) slabs."""
    i = pl.program_id(0)

    @pl.when(i == 0)
    def _():
        sse_ref[...] = jnp.zeros_like(sse_ref)
        cnt_ref[...] = jnp.zeros_like(cnt_ref)

    m = m_ref[...]                                   # (TR, 128) validity (per element)
    diff = (rgb_ref[...] - tgt_ref[...]) * m
    sse_ref[...] += jnp.sum(diff * diff, axis=0, keepdims=True)   # (1, 128)
    cnt_ref[...] += jnp.sum(m, axis=0, keepdims=True)             # (1, 128)

    @pl.when(i == pl.num_programs(0) - 1)
    def _():
        sse = jnp.sum(sse_ref[...], keepdims=True)                     # (1, 1)
        cnt = jnp.maximum(jnp.sum(cnt_ref[...], keepdims=True), 1.0)   # guard /0
        out_ref[...] = sse / cnt * 10.0


def _eikonal_kernel(mask_ref, g_ref, out_ref, acc_ref, *, scale):
    """mean((||grad||_2 - 1)^2) * lambda, grad fed flat/interleaved as (rows, 384).

    Each 384-lane row holds 128 samples as x,y,z triples.  The per-sample sum of
    squares is gathered into the centre lane of each triple with two symmetric
    lane rotations (+1 and -1 == 383), which is independent of the rotation
    direction convention; non-centre lanes are masked off by mask_ref.
    """
    i = pl.program_id(1)

    @pl.when(i == 0)
    def _():
        acc_ref[...] = jnp.zeros_like(acc_ref)

    g = g_ref[...]                                   # (TROWS, 384) f32
    sq = g * g
    s3 = sq + pltpu.roll(sq, 1, axis=1) + pltpu.roll(sq, 383, axis=1)
    err = (jnp.sqrt(s3) - 1.0) ** 2 * mask_ref[...]  # (TROWS, 384), masked lanes -> 0
    acc_ref[...] += jnp.sum(err, axis=0, keepdims=True)            # (1, 384)

    @pl.when(i == pl.num_programs(1) - 1)
    def _():
        out_ref[...] = acc_ref[...] * scale          # lane-dense (1, 384) partial


def _distortion_kernel(w_ref, d_ref, t_ref, tri_ref, out_ref, *, tile_rays):
    """Mip-NeRF-360 distortion loss per ray (DVGO-v2 prefix-sum formulation).

    Lane-major layout: samples on sublanes, rays on lanes.
        loss_r = sum_{i,j} w_i w_j |t_i - t_j| + (1/3) sum_i w_i^2 delta_i
    The inclusive scans of w and w*t are fused into one bf16 MXU matmul against
    a constant lower-triangular matrix (f32 accumulation, hi/lo bf16 split).
    """
    w = w_ref[...]                       # (S, TR) f32, pre-masked (padded samples == 0)
    d = d_ref[...]                       # (S, TR) f32
    t = t_ref[...]                       # (S, TR) f32
    tri = tri_ref[...]                   # (S, S)  bf16, tri[i, j] = 1 iff j <= i

    wt = w * t

    # f32 -> bf16 hi/lo split: tri is exact in bf16, so two bf16 passes per scan
    # recover ~f32 accuracy with f32 accumulation.
    def split(x):
        hi = x.astype(jnp.bfloat16)
        lo = (x - hi.astype(jnp.float32)).astype(jnp.bfloat16)
        return hi, lo

    w_hi, w_lo = split(w)
    wt_hi, wt_lo = split(wt)

    # One fused matmul computes all four inclusive scans along the sample axis.
    lhs = jnp.concatenate([w_hi, w_lo, wt_hi, wt_lo], axis=1)        # (S, 4*TR) bf16
    scans = jnp.dot(tri, lhs, preferred_element_type=jnp.float32)    # (S, 4*TR) f32
    cw = scans[:, :tile_rays] + scans[:, tile_rays:2 * tile_rays]          # cumsum(w)
    cwt = scans[:, 2 * tile_rays:3 * tile_rays] + scans[:, 3 * tile_rays:]  # cumsum(w*t)

    # 2 * sum_i w_i * (t_i * prefix_w_{<i} - prefix_wt_{<i}) + (1/3) sum_i w_i^2 d_i
    total = 2.0 * w * (t * (cw - w) - (cwt - wt)) + (1.0 / 3.0) * (w * w) * d
    out_ref[...] = jnp.sum(total, axis=0, keepdims=True)             # (1, TR) lane-dense


# ----------------------------------------------------------------------------
# Wrappers (pallas_call glue)
# ----------------------------------------------------------------------------
def rgb_loss(rgb, target_rays, rays_valid, tile_rows=512):
    """Masked MSE * 10.  Inputs are fed flat (metadata-only reshape, no transpose)
    as (rows, 128) slabs; the validity mask is replicated per channel so padded
    and invalid elements contribute exactly zero."""
    r = rgb.shape[0]
    n = 3 * r
    rgb_f = rgb.astype(jnp.float32).reshape(-1)
    tgt_f = target_rays.astype(jnp.float32).reshape(-1)
    m3 = jnp.repeat(rays_valid.reshape(-1).astype(jnp.float32), 3)

    rows = -(-n // 128)
    tile_rows = max(8, min(tile_rows, _round_up(rows, 8)))
    rows_p = _round_up(rows, tile_rows)
    pad = rows_p * 128 - n
    if pad:
        rgb_f = jnp.pad(rgb_f, (0, pad))
        tgt_f = jnp.pad(tgt_f, (0, pad))
        m3 = jnp.pad(m3, (0, pad))
    rgb2 = rgb_f.reshape(rows_p, 128)
    tgt2 = tgt_f.reshape(rows_p, 128)
    m2 = m3.reshape(rows_p, 128)

    out = pl.pallas_call(
        _rgb_loss_kernel,
        out_shape=jax.ShapeDtypeStruct((1, 1), jnp.float32),
        grid=(rows_p // tile_rows,),
        in_specs=[
            pl.BlockSpec((tile_rows, 128), lambda i: (i, 0)),
            pl.BlockSpec((tile_rows, 128), lambda i: (i, 0)),
            pl.BlockSpec((tile_rows, 128), lambda i: (i, 0)),
        ],
        out_specs=pl.BlockSpec((1, 1), lambda i: (0, 0)),
        scratch_shapes=[pltpu.VMEM((1, 128), jnp.float32),
                        pltpu.VMEM((1, 128), jnp.float32)],
        compiler_params=pltpu.CompilerParams(dimension_semantics=("arbitrary",)),
    )(rgb2, tgt2, m2)
    return out[0, 0]


def eikonal_loss(grad, lambda_eik, tile_rows=2048):
    """mean((||grad|| - 1)^2) * lambda.  grad (M,3) is consumed in its flat
    contiguous layout (no HBM transpose); tail samples are padded with the unit
    vector (1,0,0) so they contribute exactly 0.  tile_rows=2048 == 262144
    samples (3 MiB f32 tile) keeps the loop HBM-bound on all generations."""
    m = grad.shape[0]
    rows = -(-3 * m // 384)                              # 128 samples per 384-lane row
    tile_rows = max(8, min(tile_rows, _round_up(rows, 8)))
    num_cores = 2 if rows > tile_rows else 1             # v7x megacore split
    rows_p = _round_up(rows, num_cores * tile_rows)

    flat = grad.astype(jnp.float32).reshape(-1)          # metadata-only reshape
    pad_len = rows_p * 384 - 3 * m
    if pad_len:
        # pad whole samples with (1,0,0): unit norm -> zero contribution.
        pad = jnp.tile(jnp.array([1.0, 0.0, 0.0], jnp.float32), pad_len // 3)
        flat = jnp.concatenate([flat, pad])
    g2d = flat.reshape(rows_p, 384)

    # centre lane of each xyz triple receives the full squared norm.
    lane_mask = ((jnp.arange(384) % 3) == 1).astype(jnp.float32).reshape(1, 384)

    half = rows_p // (num_cores * tile_rows)
    out = pl.pallas_call(
        functools.partial(_eikonal_kernel, scale=float(lambda_eik) / float(m)),
        out_shape=jax.ShapeDtypeStruct((1, num_cores * 384), jnp.float32),
        grid=(num_cores, half),
        in_specs=[
            pl.BlockSpec((1, 384), lambda c, i: (0, 0)),
            pl.BlockSpec((tile_rows, 384), lambda c, i, _h=half: (c * _h + i, 0)),
        ],
        out_specs=pl.BlockSpec((1, 384), lambda c, i: (0, c)),
        scratch_shapes=[pltpu.VMEM((1, 384), jnp.float32)],
        compiler_params=pltpu.CompilerParams(
            dimension_semantics=("parallel", "arbitrary")),
    )(lane_mask, g2d)
    return jnp.sum(out)


def _pack_samples(ws, deltas, ts, rays_a, s_pad):
    """Gather flat ragged samples into lane-major (S_pad, N_rays) slabs (XLA glue).

    The validity mask is folded into ws (w == 0 at padded samples makes every
    distortion term vanish), so no separate mask slab crosses HBM.
    """
    start = rays_a[:, 1]
    ns = rays_a[:, 2]
    ar = jnp.arange(s_pad)
    idx = jnp.clip(start[None, :] + ar[:, None], 0, ws.shape[0] - 1)   # (S_pad, R)
    mask = (ar[:, None] < ns[None, :]).astype(jnp.float32)
    return ws[idx] * mask, deltas[idx], ts[idx]


def _distortion_tile_rays(s):
    # Biggest ray tile whose double-buffered inputs + in-kernel bf16/f32
    # temporaries stay well under v7x's 64 MiB physical VMEM; v5e/v6e (128 MiB)
    # have ample headroom at these sizes.  4*TR >= 2048 keeps the fused matmul
    # wide enough to fill the 256-wide MXU even at S=128.
    if s <= 128:
        return 1024
    if s <= 512:
        return 512
    return 256


def distortion_loss(ws, deltas, ts, rays_a, max_samples, tile_rays=None):
    n_rays = rays_a.shape[0]
    s = _round_up(int(max_samples), 128)           # static, lane/MXU aligned
    if tile_rays is None:
        tile_rays = _distortion_tile_rays(s)
    tile_rays = min(tile_rays, _round_up(n_rays, 128))

    ws_d, deltas_d, ts_d = _pack_samples(
        ws.astype(jnp.float32), deltas.astype(jnp.float32),
        ts.astype(jnp.float32), rays_a, s)

    rp = _round_up(n_rays, tile_rays)
    if rp != n_rays:
        pad_cfg = ((0, 0), (0, rp - n_rays))       # padded rays have w == 0 -> loss 0
        ws_d = jnp.pad(ws_d, pad_cfg)
        deltas_d = jnp.pad(deltas_d, pad_cfg)
        ts_d = jnp.pad(ts_d, pad_cfg)

    # Constant lower-triangular (inclusive-scan) matrix; exact in bf16.
    tri = (jnp.arange(s)[:, None] >= jnp.arange(s)[None, :]).astype(jnp.bfloat16)

    # Explicit VMEM budget: double-buffered f32 inputs + tri + in-kernel
    # temporaries (wt, hi/lo splits, lhs bf16, scans f32, cw/cwt).
    est = (3 * 2 * s * tile_rays * 4
           + 2 * s * s * 2
           + 2 * 2 * tile_rays * 4
           + 40 * s * tile_rays)
    vmem_limit = int(min(48 * 2**20, max(32 * 2**20, int(est * 1.25))))

    per_row = pl.pallas_call(
        functools.partial(_distortion_kernel, tile_rays=tile_rays),
        out_shape=jax.ShapeDtypeStruct((1, rp), jnp.float32),
        grid=(rp // tile_rays,),
        in_specs=[
            pl.BlockSpec((s, tile_rays), lambda i: (0, i)),
            pl.BlockSpec((s, tile_rays), lambda i: (0, i)),
            pl.BlockSpec((s, tile_rays), lambda i: (0, i)),
            pl.BlockSpec((s, s), lambda i: (0, 0)),      # tri: same block every step
        ],
        out_specs=pl.BlockSpec((1, tile_rays), lambda i: (0, i)),
        compiler_params=pltpu.CompilerParams(
            dimension_semantics=("parallel",),
            vmem_limit_bytes=vmem_limit),
    )(ws_d, deltas_d, ts_d, tri)

    per_row = per_row[0, :n_rays]
    ray_idx = rays_a[:, 0]
    return jnp.zeros((n_rays,), jnp.float32).at[ray_idx].set(per_row)


# ----------------------------------------------------------------------------
# NeRFLoss module (JAX / Pallas version)
# ----------------------------------------------------------------------------
class Config:
    use_normal = True
    lambda_eikonal = 0.1


class NeRFLoss:
    """JAX/Pallas port of the PyTorch NeRFLoss forward pass.

    `lambda_opacity` is accepted but unused, mirroring the PyTorch module whose
    forward never uses it.  `max_samples` is a static upper bound on
    samples-per-ray (rounded up to a multiple of 128 internally) so the
    distortion kernel shape never depends on device data.
    """

    def __init__(self, config, lambda_opacity=0.05, lambda_distortion=0.001,
                 max_samples=128):
        self.config = config
        self.lambda_opacity = lambda_opacity
        self.lambda_distortion = lambda_distortion
        self.max_samples = int(max_samples)

    def __call__(self, results, target, **kwargs):
        d = {}
        rays_valid = results['rays_valid'].reshape(-1)
        d['rgb'] = rgb_loss(results['rgb'], target['rays'], rays_valid)
        if self.config.use_normal:
            d['eikonal'] = eikonal_loss(results['grad'], self.config.lambda_eikonal)
        if self.lambda_distortion > 0:
            d['distortion'] = self.lambda_distortion * distortion_loss(
                results['ws'], results['deltas'], results['ts'],
                results['rays_a'], self.max_samples)
        return d


# ----------------------------------------------------------------------------
# Pure-JAX reference (for sanity check)
# ----------------------------------------------------------------------------
def _reference(results, target, config, lambda_distortion):
    d = {}
    m = results['rays_valid'].reshape(-1, 1).astype(jnp.float32)
    diff = (results['rgb'] - target['rays']) * m
    d['rgb'] = jnp.sum(diff * diff) / jnp.maximum(jnp.sum(m) * 3.0, 1.0) * 10.0
    n = jnp.linalg.norm(results['grad'], axis=-1)
    d['eikonal'] = jnp.mean((n - 1.0) ** 2) * config.lambda_eikonal

    rays_a = results['rays_a']
    max_s = int(rays_a[:, 2].max())
    start = rays_a[:, 1]
    ns = rays_a[:, 2]
    ar = jnp.arange(max_s)
    idx = jnp.clip(start[:, None] + ar[None, :], 0, results['ws'].shape[0] - 1)
    mask = (ar[None, :] < ns[:, None]).astype(jnp.float32)
    wm = results['ws'][idx] * mask
    ts_d = results['ts'][idx]
    deltas_d = results['deltas'][idx]
    tdiff = jnp.abs(ts_d[:, :, None] - ts_d[:, None, :])
    bi = jnp.einsum('ri,rj,rij->r', wm, wm, tdiff,
                    precision=jax.lax.Precision.HIGHEST)
    uni = (1.0 / 3.0) * jnp.sum(wm * wm * deltas_d, axis=1)
    per_ray = bi + uni
    ray_idx = rays_a[:, 0]
    d['distortion'] = lambda_distortion * jnp.zeros_like(per_ray).at[ray_idx].set(per_ray)
    return d


# ----------------------------------------------------------------------------
# Main
# ----------------------------------------------------------------------------
if __name__ == "__main__":
    key = jax.random.PRNGKey(0)
    k1, k2, k3, k4, k5, k6 = jax.random.split(key, 6)

    R = 16          # number of rays
    S = 32          # samples per ray
    N = R * S       # total samples

    rgb = jax.random.uniform(k1, (R, 3), jnp.float32)
    target_rays = jax.random.uniform(k2, (R, 3), jnp.float32)
    rays_valid = (jnp.arange(R) % 4) != 0                      # (R,) bool, some invalid
    grad = jax.random.normal(k3, (N, 3), jnp.float32)
    ws = jax.random.uniform(k4, (N,), jnp.float32) * 0.1
    deltas = jax.random.uniform(k5, (N,), jnp.float32) * 0.01 + 1e-3
    ts = jnp.sort(jax.random.uniform(k6, (R, S), jnp.float32) * 4.0, axis=1).reshape(-1)
    rays_a = jnp.stack(
        [jnp.arange(R), jnp.arange(R) * S, jnp.full((R,), S)], axis=1).astype(jnp.int32)

    results = {'rgb': rgb, 'rays_valid': rays_valid, 'grad': grad,
               'ws': ws, 'deltas': deltas, 'ts': ts, 'rays_a': rays_a}
    target = {'rays': target_rays}

    config = Config()
    loss_fn = NeRFLoss(config, lambda_opacity=0.05, lambda_distortion=0.001,
                       max_samples=S)

    out = loss_fn(results, target)
    out = jax.tree_util.tree_map(jax.block_until_ready, out)

    ref = _reference(results, target, config, loss_fn.lambda_distortion)
    np.testing.assert_allclose(np.asarray(out['rgb']), np.asarray(ref['rgb']),
                               rtol=1e-4, atol=1e-6)
    np.testing.assert_allclose(np.asarray(out['eikonal']), np.asarray(ref['eikonal']),
                               rtol=1e-4, atol=1e-6)
    np.testing.assert_allclose(np.asarray(out['distortion']), np.asarray(ref['distortion']),
                               rtol=5e-3, atol=1e-7)

    print("KERNEL_OK")
</pallas_src>

<mosaic_0001>
module attributes {stable_mosaic.version = 11 : i64} {
  func.func @_rgb_loss_kernel(%arg0: i32, %arg1: memref<8x128xf32, #tpu.memory_space<vmem>>, %arg2: memref<8x128xf32, #tpu.memory_space<vmem>>, %arg3: memref<8x128xf32, #tpu.memory_space<vmem>>, %arg4: memref<1x1xf32, #tpu.memory_space<vmem>>, %arg5: memref<1x128xf32, #tpu.memory_space<vmem>>, %arg6: memref<1x128xf32, #tpu.memory_space<vmem>>) attributes {dimension_semantics = [#tpu.dimension_semantics<arbitrary>], iteration_bounds = array<i64: 1>, scalar_prefetch = 0 : i64, scratch_operands = 2 : i64, tpu.core_type = #tpu.core_type<tc>, window_params = [{transform_indices = @transform_0, window_bounds = array<i64: 8, 128>}, {transform_indices = @transform_1, window_bounds = array<i64: 8, 128>}, {transform_indices = @transform_2, window_bounds = array<i64: 8, 128>}, {pipeline_mode = #tpu.pipeline_mode<synchronous>, transform_indices = @transform_3, window_bounds = array<i64: 1, 1>}]} {
    %c0_i32 = arith.constant 0 : i32
    %0 = arith.cmpi eq, %arg0, %c0_i32 : i32
    %1 = arith.extui %0 : i1 to i32
    %c0_i32_0 = arith.constant 0 : i32
    %2 = arith.cmpi ne, %1, %c0_i32_0 : i32
    scf.if %2 {
      %cst_17 = arith.constant 0.000000e+00 : f32
      %22 = vector.broadcast %cst_17 : f32 to vector<1x128xf32>
      %c0_18 = arith.constant 0 : index
      %c0_19 = arith.constant 0 : index
      %23 = vector.load %arg5[%c0_18, %c0_19] : memref<1x128xf32, #tpu.memory_space<vmem>>, vector<1x128xf32>
      tpu.vector_store %arg5[%c0_18, %c0_19], %22 {strides = array<i32>} : memref<1x128xf32, #tpu.memory_space<vmem>>, vector<1x128xf32>,
      %cst_20 = arith.constant 0.000000e+00 : f32
      %24 = vector.broadcast %cst_20 : f32 to vector<1x128xf32>
      %c0_21 = arith.constant 0 : index
      %c0_22 = arith.constant 0 : index
      %25 = vector.load %arg6[%c0_21, %c0_22] : memref<1x128xf32, #tpu.memory_space<vmem>>, vector<1x128xf32>
      tpu.vector_store %arg6[%c0_21, %c0_22], %24 {strides = array<i32>} : memref<1x128xf32, #tpu.memory_space<vmem>>, vector<1x128xf32>,
    } else {
    }
    %c0 = arith.constant 0 : index
    %c0_1 = arith.constant 0 : index
    %3 = vector.load %arg3[%c0, %c0_1] : memref<8x128xf32, #tpu.memory_space<vmem>>, vector<8x128xf32>
    %c0_2 = arith.constant 0 : index
    %c0_3 = arith.constant 0 : index
    %4 = vector.load %arg1[%c0_2, %c0_3] : memref<8x128xf32, #tpu.memory_space<vmem>>, vector<8x128xf32>
    %c0_4 = arith.constant 0 : index
    %c0_5 = arith.constant 0 : index
    %5 = vector.load %arg2[%c0_4, %c0_5] : memref<8x128xf32, #tpu.memory_space<vmem>>, vector<8x128xf32>
    %6 = arith.subf %4, %5 : vector<8x128xf32>
    %7 = arith.mulf %6, %3 : vector<8x128xf32>
    %c0_6 = arith.constant 0 : index
    %c0_7 = arith.constant 0 : index
    %8 = vector.load %arg5[%c0_6, %c0_7] : memref<1x128xf32, #tpu.memory_space<vmem>>, vector<1x128xf32>
    %9 = arith.mulf %7, %7 : vector<8x128xf32>
    %cst = arith.constant dense<0.000000e+00> : vector<128xf32>
    %10 = vector.multi_reduction <add>, %9, %cst [0] : vector<8x128xf32> to vector<128xf32>
    %11 = vector.shape_cast %10 : vector<128xf32> to vector<1x128xf32>
    %12 = arith.addf %8, %11 : vector<1x128xf32>
    %c0_8 = arith.constant 0 : index
    %c0_9 = arith.constant 0 : index
    %13 = vector.load %arg5[%c0_8, %c0_9] : memref<1x128xf32, #tpu.memory_space<vmem>>, vector<1x128xf32>
    tpu.vector_store %arg5[%c0_8, %c0_9], %12 {strides = array<i32>} : memref<1x128xf32, #tpu.memory_space<vmem>>, vector<1x128xf32>,
    %c0_10 = arith.constant 0 : index
    %c0_11 = arith.constant 0 : index
    %14 = vector.load %arg6[%c0_10, %c0_11] : memref<1x128xf32, #tpu.memory_space<vmem>>, vector<1x128xf32>
    %cst_12 = arith.constant dense<0.000000e+00> : vector<128xf32>
    %15 = vector.multi_reduction <add>, %3, %cst_12 [0] : vector<8x128xf32> to vector<128xf32>
    %16 = vector.shape_cast %15 : vector<128xf32> to vector<1x128xf32>
    %17 = arith.addf %14, %16 : vector<1x128xf32>
    %c0_13 = arith.constant 0 : index
    %c0_14 = arith.constant 0 : index
    %18 = vector.load %arg6[%c0_13, %c0_14] : memref<1x128xf32, #tpu.memory_space<vmem>>, vector<1x128xf32>
    tpu.vector_store %arg6[%c0_13, %c0_14], %17 {strides = array<i32>} : memref<1x128xf32, #tpu.memory_space<vmem>>, vector<1x128xf32>,
    %c0_i32_15 = arith.constant 0 : i32
    %19 = arith.cmpi eq, %arg0, %c0_i32_15 : i32
    %20 = arith.extui %19 : i1 to i32
    %c0_i32_16 = arith.constant 0 : i32
    %21 = arith.cmpi ne, %20, %c0_i32_16 : i32
    scf.if %21 {
      %c0_17 = arith.constant 0 : index
      %c0_18 = arith.constant 0 : index
      %22 = vector.load %arg5[%c0_17, %c0_18] : memref<1x128xf32, #tpu.memory_space<vmem>>, vector<1x128xf32>
      %23 = vector.shape_cast %22 : vector<1x128xf32> to vector<1x1x128xf32>
      %cst_19 = arith.constant dense<0.000000e+00> : vector<1xf32>
      %24 = vector.multi_reduction <add>, %23, %cst_19 [1, 2] : vector<1x1x128xf32> to vector<1xf32>
      %25 = vector.shape_cast %24 : vector<1xf32> to vector<1x1x1xf32>
      %26 = vector.extract %25[0, 0, 0] : f32 from vector<1x1x1xf32>
      %27 = vector.broadcast %26 : f32 to vector<1x1xf32>
      %c0_20 = arith.constant 0 : index
      %c0_21 = arith.constant 0 : index
      %28 = vector.load %arg6[%c0_20, %c0_21] : memref<1x128xf32, #tpu.memory_space<vmem>>, vector<1x128xf32>
      %29 = vector.shape_cast %28 : vector<1x128xf32> to vector<1x1x128xf32>
      %cst_22 = arith.constant dense<0.000000e+00> : vector<1xf32>
      %30 = vector.multi_reduction <add>, %29, %cst_22 [1, 2] : vector<1x1x128xf32> to vector<1xf32>
      %31 = vector.shape_cast %30 : vector<1xf32> to vector<1x1x1xf32>
      %32 = vector.extract %31[0, 0, 0] : f32 from vector<1x1x1xf32>
      %33 = vector.broadcast %32 : f32 to vector<1x1xf32>
      %cst_23 = arith.constant 1.000000e+00 : f32
      %34 = vector.broadcast %cst_23 : f32 to vector<1x1xf32>
      %35 = arith.maximumf %33, %34 : vector<1x1xf32>
      %36 = arith.divf %27, %35 : vector<1x1xf32>
      %cst_24 = arith.constant 1.000000e+01 : f32
      %37 = vector.broadcast %cst_24 : f32 to vector<1x1xf32>
      %38 = arith.mulf %36, %37 : vector<1x1xf32>
      %c0_25 = arith.constant 0 : index
      %c0_26 = arith.constant 0 : index
      %39 = vector.load %arg4[%c0_25, %c0_26] : memref<1x1xf32, #tpu.memory_space<vmem>>, vector<1x1xf32>
      tpu.vector_store %arg4[%c0_25, %c0_26], %38 {strides = array<i32>} : memref<1x1xf32, #tpu.memory_space<vmem>>, vector<1x1xf32>,
    } else {
    }
    return
  }
  func.func @transform_0(%arg0: i32) -> (i32, i32) {
    %c0_i32 = arith.constant 0 : i32
    %c0_i32_0 = arith.constant 0 : i32
    return %arg0, %c0_i32 : i32, i32
  }
  func.func @transform_1(%arg0: i32) -> (i32, i32) {
    %c0_i32 = arith.constant 0 : i32
    %c0_i32_0 = arith.constant 0 : i32
    return %arg0, %c0_i32 : i32, i32
  }
  func.func @transform_2(%arg0: i32) -> (i32, i32) {
    %c0_i32 = arith.constant 0 : i32
    %c0_i32_0 = arith.constant 0 : i32
    return %arg0, %c0_i32 : i32, i32
  }
  func.func @transform_3(%arg0: i32) -> (i32, i32) {
    %c0_i32 = arith.constant 0 : i32
    %c0_i32_0 = arith.constant 0 : i32
    %c0_i32_1 = arith.constant 0 : i32
    return %c0_i32, %c0_i32_0 : i32, i32
  }
}

</mosaic_0001>

<llo_original>
// kernel: tpu_custom_call.1
$region0: #{tpu_custom_call.1}
  #allocation0 [shape = 'u32[]', space=smem, size = 0x4, offset = 0x4, fixed_abs, tag = 'smem constant byte address 0x4 - core index']
  #allocation1 [shape = 'u32[144,128]{1,0:T(1,128)}', space=vmem, size = 0x12000, scoped, tag = 'internal scratch']
  #allocation2 [shape = 'f32[1,128]{1,0:T(1,128)}', space=vmem, size = 0x200, scoped, tag = 'scratch operand']
  #allocation3 [shape = 'f32[1,128]{1,0:T(1,128)}', space=vmem, size = 0x200, scoped, tag = 'scratch operand']
  %s0 = inlined_call_operand.hbm [shape: f32[8,128], index: 0, kind: input, shape index: {}]
  %s1 = inlined_call_operand.hbm [shape: f32[8,128], index: 1, kind: input, shape index: {}]
  %s2 = inlined_call_operand.hbm [shape: f32[8,128], index: 2, kind: input, shape index: {}]
  %s3 = inlined_call_operand.hbm [shape: f32[1,1], index: 3, kind: output, shape index: {}]
  %s4 = sld [smem:[#allocation0]]
  $region42: #{tpu_custom_call.1} parent=0
    _
  %s6 = ssub.s32 1, %s4
  %s7 = scalar_select 0, %s6, %s4
  $region1: #{tpu_custom_call.1} parent=0
    #allocation4 [shape = 'u8[4096]{0}', space=vmem, size = 0x1000, scoped, tag = 'input window, operand 0, single buffered']
    #allocation5 [shape = 's32[1]{0}', space=sflag, size = 0x4, scoped, tag = 'scoped memory for tpu_custom_call.1']
    #allocation6 [shape = 's32[1]{0}', space=sflag, size = 0x4, scoped, tag = 'scoped memory for tpu_custom_call.1']
    #allocation7 [shape = 'u8[4096]{0}', space=vmem, size = 0x1000, scoped, tag = 'input window, operand 1, single buffered']
    #allocation8 [shape = 's32[1]{0}', space=sflag, size = 0x4, scoped, tag = 'scoped memory for tpu_custom_call.1']
    #allocation9 [shape = 'u8[4096]{0}', space=vmem, size = 0x1000, scoped, tag = 'input window, operand 2, single buffered']
    #allocation10 [shape = 'u8[512]{0}', space=vmem, size = 0x400, scoped, tag = 'output window, operand 0, single buffered']
    %8 = vsyncpa [#allocation5], 0
    %9 = vsyncpa [#allocation8], 0
    %10 = vsyncpa [#allocation6], 0
    // Predicated region
    $region2: #{tpu_custom_call.1} parent=1 // pred_check
      _
    $region3: #{tpu_custom_call.1} parent=1 // pred_check_branch
      %12 = sbr.rel (0) target = $region5
    $region4: #{tpu_custom_call.1} parent=1 // pred_region
      %s14 = ssub.s32 128, 128
      %15 = vsyncadd [#allocation5], %s14
      %s17 = sshll.u32 [#allocation4], 4
      %s18 = int_to_ptr.vmem [resolvable:$true] %s17
      %20 = dma.hbm_to_vmem [thread:$0]  %s0, 128, %s18, [#allocation5]
    $region5: #{tpu_custom_call.1} parent=1 // pred_fallthru
      _
    // Predicated region
    $region6: #{tpu_custom_call.1} parent=1 // pred_check
      _
    $region7: #{tpu_custom_call.1} parent=1 // pred_check_branch
      %22 = sbr.rel (0) target = $region9
    $region8: #{tpu_custom_call.1} parent=1 // pred_region
      %s24 = ssub.s32 128, 128
      %25 = vsyncadd [#allocation8], %s24
      %s27 = sshll.u32 [#allocation7], 4
      %s28 = int_to_ptr.vmem [resolvable:$true] %s27
      %30 = dma.hbm_to_vmem [thread:$0]  %s1, 128, %s28, [#allocation8]
    $region9: #{tpu_custom_call.1} parent=1 // pred_fallthru
      _
    // Predicated region
    $region10: #{tpu_custom_call.1} parent=1 // pred_check
      _
    $region11: #{tpu_custom_call.1} parent=1 // pred_check_branch
      %32 = sbr.rel (0) target = $region13
    $region12: #{tpu_custom_call.1} parent=1 // pred_region
      %s34 = ssub.s32 128, 128
      %35 = vsyncadd [#allocation8], %s34
      %s37 = sshll.u32 [#allocation9], 4
      %s38 = int_to_ptr.vmem [resolvable:$true] %s37
      %40 = dma.hbm_to_vmem [thread:$0]  %s2, 128, %s38, [#allocation8]
    $region13: #{tpu_custom_call.1} parent=1 // pred_fallthru
      _
    // Predicated region
    $region14: #{tpu_custom_call.1} parent=1 // pred_check
      _
    $region15: #{tpu_custom_call.1} parent=1 // pred_check_branch
      %42 = sbr.rel (0) target = $region17
    $region16: #{tpu_custom_call.1} parent=1 // pred_region
      %43 = dma.done [#allocation5], 128
    $region17: #{tpu_custom_call.1} parent=1 // pred_fallthru
      _
    // Predicated region
    $region18: #{tpu_custom_call.1} parent=1 // pred_check
      _
    $region19: #{tpu_custom_call.1} parent=1 // pred_check_branch
      %45 = sbr.rel (0) target = $region21
    $region20: #{tpu_custom_call.1} parent=1 // pred_region
      %46 = dma.done [#allocation8], 128
    $region21: #{tpu_custom_call.1} parent=1 // pred_fallthru
      _
    // Predicated region
    $region22: #{tpu_custom_call.1} parent=1 // pred_check
      _
    $region23: #{tpu_custom_call.1} parent=1 // pred_check_branch
      %48 = sbr.rel (0) target = $region25
    $region24: #{tpu_custom_call.1} parent=1 // pred_region
      %49 = dma.done [#allocation8], 128
    $region25: #{tpu_custom_call.1} parent=1 // pred_fallthru
      _
    %p50 = scmp.eq.s32.totalorder 0, 0
    // Predicated region
    $region26: #{tpu_custom_call.1} parent=1 // pred_check
      %p51 = pneg %p50
    $region27: #{tpu_custom_call.1} parent=1 // pred_check_branch
      %53 = sbr.rel (%p51) target = $region29
    $region28: #{tpu_custom_call.1} parent=1 // pred_region
      %54 = vst [vmem:[#allocation2] sm:$0x1] 0.0
      %55 = vst [vmem:[#allocation3] sm:$0x1] 0.0
    $region29: #{tpu_custom_call.1} parent=1 // pred_fallthru
      _
    %v56 = vld [vmem:[#allocation9] sm:$0xff]
    %v57 = vld [vmem:[#allocation4] sm:$0xff]
    %v58 = vld [vmem:[#allocation7] sm:$0xff]
    %v59 = vsub.f32 %v57, %v58
    %v60 = vmul.f32 %v59, %v56
    %v61 = vld [vmem:[#allocation2] sm:$0x1]
    %v62 = vmul.f32 %v60, %v60
    %v63 = vrot.slane %v62, 4
    %v64 = vadd.f32 %v62, %v63
    %v65 = vrot.slane %v64, 2
    %v66 = vadd.f32 %v64, %v65
    %v67 = vrot.slane %v66, 1
    %v68 = vadd.f32 %v66, %v67
    %v69 = vadd.f32 %v61, %v68
    %70 = vst [vmem:[#allocation2] sm:$0x1] %v69
    %v71 = vld [vmem:[#allocation3] sm:$0x1]
    %v72 = vrot.slane %v56, 4
    %v73 = vadd.f32 %v56, %v72
    %v74 = vrot.slane %v73, 2
    %v75 = vadd.f32 %v73, %v74
    %v76 = vrot.slane %v75, 1
    %v77 = vadd.f32 %v75, %v76
    %v78 = vadd.f32 %v71, %v77
    %79 = vst [vmem:[#allocation3] sm:$0x1] %v78
    // Predicated region
    $region30: #{tpu_custom_call.1} parent=1 // pred_check
      %p80 = pneg %p50
    $region31: #{tpu_custom_call.1} parent=1 // pred_check_branch
      %82 = sbr.rel (%p80) target = $region33
    $region32: #{tpu_custom_call.1} parent=1 // pred_region
      %v83 = vld [vmem:[#allocation2] sm:$0x1]
      %vm84 = vcmask 1040384
      %v85 = vsel %vm84, %v83, 0.0
      %86 = vadd.xlane.f32.xlu0 %v85
      %v87 = vpop.xlane.xlu0 %86
      %v88 = vrot.slane %v87, 4
      %v89 = vadd.f32 %v87, %v88
      %v90 = vrot.slane %v89, 2
      %v91 = vadd.f32 %v89, %v90
      %v92 = vrot.slane %v91, 1
      %v93 = vadd.f32 %v91, %v92
      %s94 = vtos %v93
      %v95 = vstv %s94
      %v96 = vld [vmem:[#allocation3] sm:$0x1]
      %v97 = vsel %vm84, %v96, 0.0
      %98 = vadd.xlane.f32.xlu0 %v97
      %v99 = vpop.xlane.xlu0 %98
      %v100 = vrot.slane %v99, 4
      %v101 = vadd.f32 %v99, %v100
      %v102 = vrot.slane %v101, 2
      %v103 = vadd.f32 %v101, %v102
      %v104 = vrot.slane %v103, 1
      %v105 = vadd.f32 %v103, %v104
      %s106 = vtos %v105
      %v107 = vstv %s106
      %v108 = vmax.f32 %v107, 1.0
      %v109 = vrcp.pop %v108
      %v110 = vmul.f32 %v95, %v109
      %v111 = vmul.f32 %v110, 10.0
      %vm112 = vcmask 0
      %113 = vst.msk [vmem:[#allocation10] sm:$0x1] %vm112, %v111
    $region33: #{tpu_custom_call.1} parent=1 // pred_fallthru
      _
    // Predicated region
    $region34: #{tpu_custom_call.1} parent=1 // pred_check
      _
    $region35: #{tpu_custom_call.1} parent=1 // pred_check_branch
      %115 = sbr.rel (0) target = $region37
    $region36: #{tpu_custom_call.1} parent=1 // pred_region
      %s117 = ssub.s32 16, 16
      %118 = vsyncadd [#allocation6], %s117
      %s120 = sshll.u32 [#allocation10], 4
      %s121 = int_to_ptr.vmem [resolvable:$true] %s120
      %123 = dma.vmem_to_hbm [thread:$0]  %s121, 16, %s3, [#allocation6]
    $region37: #{tpu_custom_call.1} parent=1 // pred_fallthru
      _
    // Predicated region
    $region38: #{tpu_custom_call.1} parent=1 // pred_check
      _
    $region39: #{tpu_custom_call.1} parent=1 // pred_check_branch
      %125 = sbr.rel (0) target = $region41
    $region40: #{tpu_custom_call.1} parent=1 // pred_region
      %126 = dma.done [#allocation6], 16
    $region41: #{tpu_custom_call.1} parent=1 // pred_fallthru
      _
    %127 = vsyncpa [#allocation5], 1
    %128 = vsyncpa [#allocation8], 1
    %129 = vsyncpa [#allocation6], 1

</llo_original>
